<compile_context>
chip_gen: v7x
topology: tpu7x:2x2x1
jax: 0.10.0
libtpu: 0.0.40
codegen_flags: <defaults>
</compile_context>

<pallas_src>
import functools

import jax
import jax.numpy as jnp
from jax import lax
from jax.experimental import pallas as pl
from jax.experimental.pallas import tpu as pltpu

BN_EPS = 1e-5


# ----------------------------------------------------------------------------
# Pallas kernel: single-dot space-to-depth conv + folded-BN shift + SiLU
# ----------------------------------------------------------------------------
def _conv_bn_silu_kernel(x_ref, w_ref, shift_ref, o_ref, *, ke, oh, ow, epi_dtype):
    """Fused (s2d tap) conv + BN shift + SiLU on one VMEM-resident image.

    x_ref:     (PH, PW, Cs)   bf16  space-to-depth input, Cs = 4*Cin
    w_ref:     (Cout, K)      bf16  K = ke*ke*Cs, BN scale folded in, tap-major
    shift_ref: (Cout, 1)      f32   folded BN shift (includes conv bias)
    o_ref:     (Cout, OH*OW)        lane-dense (channel-major) activations
    """
    x = x_ref[...]
    cs = x.shape[-1]
    m = oh * ow
    # Single in-VMEM im2col: (M, K) patch matrix, K ordered (di, dj, r, c, ci).
    taps = [x[di:di + oh, dj:dj + ow, :].reshape(m, cs)
            for di in range(ke) for dj in range(ke)]
    patches = jnp.concatenate(taps, axis=-1)                       # (M, K) bf16
    # One MXU call, f32 accumulation.  Contract K with K (rhs transposed) so the
    # result comes out channel-major / lane-dense: (Cout, M).
    acc = lax.dot_general(
        w_ref[...], patches,
        dimension_numbers=(((1,), (1,)), ((), ())),
        preferred_element_type=jnp.float32)                        # (Cout, M) f32
    y = (acc + shift_ref[...]).astype(epi_dtype)   # bias add in f32, SiLU in epi dtype
    o_ref[...] = (y * jax.nn.sigmoid(y)).astype(o_ref.dtype)


# ----------------------------------------------------------------------------
# Wrapper glue (plain JAX; only 1x-byte pad + space-to-depth rearrangements)
# ----------------------------------------------------------------------------
def _pad_space_to_depth_nchw(x_nchw, p):
    """NCHW -> pad spatial by p -> 2x2 space-to-depth, phase order (r, c, ci).

    Returns (N, HP/2, WP/2, 4*C).  This single transpose also absorbs the
    NCHW -> channels-last conversion the kernel wants.
    """
    n, c, h, w = x_nchw.shape
    x = jnp.pad(x_nchw, ((0, 0), (0, 0), (p, p), (p, p)))
    hp, wp = h + 2 * p, w + 2 * p
    assert hp % 2 == 0 and wp % 2 == 0
    x = x.reshape(n, c, hp // 2, 2, wp // 2, 2)
    x = jnp.transpose(x, (0, 2, 4, 3, 5, 1))          # (n, A, B, r, c, ci)
    return x.reshape(n, hp // 2, wp // 2, 4 * c)


def _prep_stage(params, k):
    """Fold BN into the conv weight; rearrange to a (Cout, K) tap matrix."""
    w, b = params["w"], params["b"]                   # w: (Cout, Cin, k, k)
    c_out, c_in = w.shape[0], w.shape[1]
    scale = params["gamma"] / jnp.sqrt(params["var"] + BN_EPS)
    shift = (b - params["mean"]) * scale + params["beta"]
    w = w * scale[:, None, None, None]                # fold BN scale into weights
    kp = 2 * ((k + 1) // 2)                           # pad kernel to even extent
    if kp != k:
        w = jnp.pad(w, ((0, 0), (0, 0), (0, kp - k), (0, kp - k)))
    ke = kp // 2                                      # tap extent after s2d
    # (Cout, Cin, kp, kp) -> (co, ci, di, r, dj, c) -> (co, di, dj, r, c, ci)
    w = w.reshape(c_out, c_in, ke, 2, ke, 2)
    w = jnp.transpose(w, (0, 2, 4, 3, 5, 1))
    w = w.reshape(c_out, ke * ke * 4 * c_in)          # K order matches patch build
    return w.astype(jnp.bfloat16), shift[:, None].astype(jnp.float32), ke


def conv_bn_silu_stage(x_nchw, params, k, s, p, *, out_dtype, epi_dtype):
    """One ConvBNSiLU stage (stride 2) -> (N, Cout, OH*OW) = flattened NCHW."""
    assert s == 2
    w2d, shift, ke = _prep_stage(params, k)
    c_out, kdim = w2d.shape

    xs = _pad_space_to_depth_nchw(x_nchw, p).astype(jnp.bfloat16)  # (N, PH, PW, 4Cin)
    n, ph, pw, cs = xs.shape
    assert kdim == ke * ke * cs
    oh, ow = ph - ke + 1, pw - ke + 1
    m = oh * ow

    out = pl.pallas_call(
        functools.partial(_conv_bn_silu_kernel, ke=ke, oh=oh, ow=ow,
                          epi_dtype=epi_dtype),
        out_shape=jax.ShapeDtypeStruct((n, c_out, m), out_dtype),
        # One image per grid step: >= 2 "parallel" steps keep both v7x TCs busy
        # and fit VMEM trivially at these sizes.  (On v5e with tiny images one
        # could instead fold the batch into M to fill the 128-row MXU; at real
        # YOLO sizes add spatial row tiling instead -- see TODO at top.)
        grid=(n,),
        in_specs=[
            pl.BlockSpec((None, ph, pw, cs), lambda i: (i, 0, 0, 0)),
            pl.BlockSpec((c_out, kdim), lambda i: (0, 0)),
            pl.BlockSpec((c_out, 1), lambda i: (0, 0)),
        ],
        out_specs=pl.BlockSpec((None, c_out, m), lambda i: (i, 0, 0)),
        compiler_params=pltpu.CompilerParams(dimension_semantics=("parallel",)),
    )(xs, w2d, shift)
    return out, (oh, ow)


def _epilogue_dtype():
    """bf16 epilogue on chips with bf16 VPU/EUP (v6e/v7x); f32 otherwise (v5e...)."""
    try:
        kind = jax.devices()[0].device_kind.lower()
    except Exception:
        return jnp.float32
    return jnp.bfloat16 if ("v6" in kind or "v7" in kind) else jnp.float32


def focus_forward(x_nchw, p1, p2, *, epi_dtype=jnp.float32):
    n = x_nchw.shape[0]
    c2 = p1["w"].shape[0]
    # Stage 1: Conv(6,2,2)+BN+SiLU, bf16 intermediate (stage 2 eats bf16 anyway).
    y1, (h1, w1) = conv_bn_silu_stage(x_nchw, p1, k=6, s=2, p=2,
                                      out_dtype=jnp.bfloat16, epi_dtype=epi_dtype)
    y1 = y1.reshape(n, c2, h1, w1)                    # channel-major == NCHW already
    # Stage 2: Conv(3,2,1)+BN+SiLU, f32 final output.
    y2, (h2, w2) = conv_bn_silu_stage(y1, p2, k=3, s=2, p=1,
                                      out_dtype=jnp.float32, epi_dtype=epi_dtype)
    return y2.reshape(n, 2 * c2, h2, w2)              # NCHW, no output transpose


# ----------------------------------------------------------------------------
# Pure-JAX reference (lax.conv) for correctness check
# ----------------------------------------------------------------------------
def _ref_stage(x_nhwc, params, k, s, p):
    w = jnp.transpose(params["w"], (2, 3, 1, 0))      # HWIO
    y = lax.conv_general_dilated(
        x_nhwc, w, window_strides=(s, s), padding=[(p, p), (p, p)],
        dimension_numbers=("NHWC", "HWIO", "NHWC"),
    ) + params["b"][None, None, None, :]
    scale = params["gamma"] / jnp.sqrt(params["var"] + BN_EPS)
    y = (y - params["mean"]) * scale + params["beta"]
    return y * jax.nn.sigmoid(y)


def focus_ref(x_nchw, p1, p2):
    x = jnp.transpose(x_nchw, (0, 2, 3, 1))
    y = _ref_stage(x, p1, 6, 2, 2)
    y = _ref_stage(y, p2, 3, 2, 1)
    return jnp.transpose(y, (0, 3, 1, 2))


# ----------------------------------------------------------------------------
# Deterministic parameter init
# ----------------------------------------------------------------------------
def make_stage_params(key, c_in, c_out, k):
    ks = jax.random.split(key, 6)
    return {
        "w": jax.random.normal(ks[0], (c_out, c_in, k, k), jnp.float32) * 0.1,
        "b": jax.random.normal(ks[1], (c_out,), jnp.float32) * 0.1,
        "gamma": jax.random.uniform(ks[2], (c_out,), jnp.float32, 0.5, 1.5),
        "beta": jax.random.normal(ks[3], (c_out,), jnp.float32) * 0.1,
        "mean": jax.random.normal(ks[4], (c_out,), jnp.float32) * 0.1,
        "var": jax.random.uniform(ks[5], (c_out,), jnp.float32, 0.5, 1.5),
    }


if __name__ == "__main__":
    key = jax.random.PRNGKey(0)
    k_x, k_p1, k_p2 = jax.random.split(key, 3)

    # Focus(c1=4, c2=8), input (2, 4, 16, 16) NCHW
    N, C1, C2, H, W = 2, 4, 8, 16, 16
    x = jax.random.normal(k_x, (N, C1, H, W), jnp.float32)

    p1 = make_stage_params(k_p1, C1, C2, 6)           # Conv2d(4, 8, 6, 2, 2) + BN + SiLU
    p2 = make_stage_params(k_p2, C2, 2 * C2, 3)       # Conv2d(8, 16, 3, 2, 1) + BN + SiLU

    fwd = jax.jit(functools.partial(focus_forward, epi_dtype=_epilogue_dtype()))
    out = jax.block_until_ready(fwd(x, p1, p2))
    assert out.shape == (N, 2 * C2, H // 4, W // 4), out.shape

    ref = jax.block_until_ready(focus_ref(x, p1, p2))
    # bf16 MXU operands / bf16 intermediates through two conv stages (K=144, 128)
    # with BN scales up to ~2.1: the abs floor covers cancellation outputs whose
    # absolute error accumulates from full-size bf16-rounded products.
    err = jnp.abs(out - ref)
    tol = 4e-2 + 3e-2 * jnp.abs(ref)
    assert bool(jnp.all(err <= tol)), float(jnp.max(err))

    print("KERNEL_OK")
</pallas_src>

<mosaic_0001>
module attributes {stable_mosaic.version = 11 : i64} {
  func.func @_conv_bn_silu_kernel(%arg0: i32, %arg1: memref<1x10x10x16xbf16, #tpu.memory_space<vmem>>, %arg2: memref<8x144xbf16, #tpu.memory_space<vmem>>, %arg3: memref<8x1xf32, #tpu.memory_space<vmem>>, %arg4: memref<1x8x64xbf16, #tpu.memory_space<vmem>>) attributes {dimension_semantics = [#tpu.dimension_semantics<parallel>], iteration_bounds = array<i64: 2>, scalar_prefetch = 0 : i64, scratch_operands = 0 : i64, tpu.core_type = #tpu.core_type<tc>, window_params = [{transform_indices = @transform_0, window_bounds = array<i64: 1, 10, 10, 16>}, {pipeline_mode = #tpu.pipeline_mode<synchronous>, transform_indices = @transform_1, window_bounds = array<i64: 8, 144>}, {pipeline_mode = #tpu.pipeline_mode<synchronous>, transform_indices = @transform_2, window_bounds = array<i64: 8, 1>}, {transform_indices = @transform_3, window_bounds = array<i64: 1, 8, 64>}]} {
    %c0 = arith.constant 0 : index
    %c0_0 = arith.constant 0 : index
    %c0_1 = arith.constant 0 : index
    %c0_2 = arith.constant 0 : index
    %0 = vector.load %arg1[%c0, %c0_0, %c0_1, %c0_2] : memref<1x10x10x16xbf16, #tpu.memory_space<vmem>>, vector<1x10x10x16xbf16>
    %1 = vector.shape_cast %0 : vector<1x10x10x16xbf16> to vector<10x10x16xbf16>
    %2 = vector.extract_strided_slice %1 {offsets = [0, 0, 0], sizes = [8, 8, 16], strides = [1, 1, 1]} : vector<10x10x16xbf16> to vector<8x8x16xbf16>
    %3 = vector.shape_cast %2 : vector<8x8x16xbf16> to vector<64x16xbf16>
    %4 = vector.extract_strided_slice %1 {offsets = [0, 1, 0], sizes = [8, 8, 16], strides = [1, 1, 1]} : vector<10x10x16xbf16> to vector<8x8x16xbf16>
    %5 = vector.shape_cast %4 : vector<8x8x16xbf16> to vector<64x16xbf16>
    %6 = vector.extract_strided_slice %1 {offsets = [0, 2, 0], sizes = [8, 8, 16], strides = [1, 1, 1]} : vector<10x10x16xbf16> to vector<8x8x16xbf16>
    %7 = vector.shape_cast %6 : vector<8x8x16xbf16> to vector<64x16xbf16>
    %8 = vector.extract_strided_slice %1 {offsets = [1, 0, 0], sizes = [8, 8, 16], strides = [1, 1, 1]} : vector<10x10x16xbf16> to vector<8x8x16xbf16>
    %9 = vector.shape_cast %8 : vector<8x8x16xbf16> to vector<64x16xbf16>
    %10 = vector.extract_strided_slice %1 {offsets = [1, 1, 0], sizes = [8, 8, 16], strides = [1, 1, 1]} : vector<10x10x16xbf16> to vector<8x8x16xbf16>
    %11 = vector.shape_cast %10 : vector<8x8x16xbf16> to vector<64x16xbf16>
    %12 = vector.extract_strided_slice %1 {offsets = [1, 2, 0], sizes = [8, 8, 16], strides = [1, 1, 1]} : vector<10x10x16xbf16> to vector<8x8x16xbf16>
    %13 = vector.shape_cast %12 : vector<8x8x16xbf16> to vector<64x16xbf16>
    %14 = vector.extract_strided_slice %1 {offsets = [2, 0, 0], sizes = [8, 8, 16], strides = [1, 1, 1]} : vector<10x10x16xbf16> to vector<8x8x16xbf16>
    %15 = vector.shape_cast %14 : vector<8x8x16xbf16> to vector<64x16xbf16>
    %16 = vector.extract_strided_slice %1 {offsets = [2, 1, 0], sizes = [8, 8, 16], strides = [1, 1, 1]} : vector<10x10x16xbf16> to vector<8x8x16xbf16>
    %17 = vector.shape_cast %16 : vector<8x8x16xbf16> to vector<64x16xbf16>
    %18 = vector.extract_strided_slice %1 {offsets = [2, 2, 0], sizes = [8, 8, 16], strides = [1, 1, 1]} : vector<10x10x16xbf16> to vector<8x8x16xbf16>
    %19 = vector.shape_cast %18 : vector<8x8x16xbf16> to vector<64x16xbf16>
    %20 = tpu.concatenate %3, %5, %7, %9, %11, %13, %15, %17, %19 in 1 : vector<64x16xbf16>, vector<64x16xbf16>, vector<64x16xbf16>, vector<64x16xbf16>, vector<64x16xbf16>, vector<64x16xbf16>, vector<64x16xbf16>, vector<64x16xbf16>, vector<64x16xbf16> -> vector<64x144xbf16>
    %c0_3 = arith.constant 0 : index
    %c0_4 = arith.constant 0 : index
    %21 = vector.load %arg2[%c0_3, %c0_4] : memref<8x144xbf16, #tpu.memory_space<vmem>>, vector<8x144xbf16>
    %cst = arith.constant dense<0.000000e+00> : vector<8x64xf32>
    %22 = tpu.matmul %21, %20, %cst {dimension_numbers = #tpu.dot_dimension_numbers<[1], [1], [0], [0], [0, 0, 1, 0], [], []>} : vector<8x144xbf16>, vector<64x144xbf16>, vector<8x64xf32> -> vector<8x64xf32>
    %c0_5 = arith.constant 0 : index
    %c0_6 = arith.constant 0 : index
    %23 = vector.load %arg3[%c0_5, %c0_6] : memref<8x1xf32, #tpu.memory_space<vmem>>, vector<8x1xf32>
    %24 = vector.broadcast %23 : vector<8x1xf32> to vector<8x64xf32>
    %25 = arith.addf %22, %24 : vector<8x64xf32>
    %26 = arith.negf %25 : vector<8x64xf32>
    %27 = math.exp %26 : vector<8x64xf32>
    %cst_7 = arith.constant 1.000000e+00 : f32
    %28 = vector.broadcast %cst_7 : f32 to vector<8x64xf32>
    %29 = arith.addf %28, %27 : vector<8x64xf32>
    %30 = arith.divf %28, %29 : vector<8x64xf32>
    %31 = arith.mulf %25, %30 : vector<8x64xf32>
    %32 = arith.truncf %31 : vector<8x64xf32> to vector<8x64xbf16>
    %c0_8 = arith.constant 0 : index
    %c0_9 = arith.constant 0 : index
    %c0_10 = arith.constant 0 : index
    %33 = vector.load %arg4[%c0_8, %c0_9, %c0_10] : memref<1x8x64xbf16, #tpu.memory_space<vmem>>, vector<1x8x64xbf16>
    %34 = vector.shape_cast %33 : vector<1x8x64xbf16> to vector<8x64xbf16>
    %35 = vector.shape_cast %32 : vector<8x64xbf16> to vector<1x8x64xbf16>
    tpu.vector_store %arg4[%c0_8, %c0_9, %c0_10], %35 {strides = array<i32>} : memref<1x8x64xbf16, #tpu.memory_space<vmem>>, vector<1x8x64xbf16>,
    return
  }
  func.func @transform_0(%arg0: i32) -> (i32, i32, i32, i32) {
    %c0_i32 = arith.constant 0 : i32
    %c0_i32_0 = arith.constant 0 : i32
    %c0_i32_1 = arith.constant 0 : i32
    %c0_i32_2 = arith.constant 0 : i32
    return %arg0, %c0_i32, %c0_i32_0, %c0_i32_1 : i32, i32, i32, i32
  }
  func.func @transform_1(%arg0: i32) -> (i32, i32) {
    %c0_i32 = arith.constant 0 : i32
    %c0_i32_0 = arith.constant 0 : i32
    %c0_i32_1 = arith.constant 0 : i32
    return %c0_i32, %c0_i32_0 : i32, i32
  }
  func.func @transform_2(%arg0: i32) -> (i32, i32) {
    %c0_i32 = arith.constant 0 : i32
    %c0_i32_0 = arith.constant 0 : i32
    %c0_i32_1 = arith.constant 0 : i32
    return %c0_i32, %c0_i32_0 : i32, i32
  }
  func.func @transform_3(%arg0: i32) -> (i32, i32, i32) {
    %c0_i32 = arith.constant 0 : i32
    %c0_i32_0 = arith.constant 0 : i32
    %c0_i32_1 = arith.constant 0 : i32
    return %arg0, %c0_i32, %c0_i32_0 : i32, i32, i32
  }
}

module attributes {stable_mosaic.version = 11 : i64} {
  func.func @_conv_bn_silu_kernel(%arg0: i32, %arg1: memref<1x5x5x32xbf16, #tpu.memory_space<vmem>>, %arg2: memref<16x128xbf16, #tpu.memory_space<vmem>>, %arg3: memref<16x1xf32, #tpu.memory_space<vmem>>, %arg4: memref<1x16x16xf32, #tpu.memory_space<vmem>>) attributes {dimension_semantics = [#tpu.dimension_semantics<parallel>], iteration_bounds = array<i64: 2>, scalar_prefetch = 0 : i64, scratch_operands = 0 : i64, tpu.core_type = #tpu.core_type<tc>, window_params = [{transform_indices = @transform_0, window_bounds = array<i64: 1, 5, 5, 32>}, {pipeline_mode = #tpu.pipeline_mode<synchronous>, transform_indices = @transform_1, window_bounds = array<i64: 16, 128>}, {pipeline_mode = #tpu.pipeline_mode<synchronous>, transform_indices = @transform_2, window_bounds = array<i64: 16, 1>}, {transform_indices = @transform_3, window_bounds = array<i64: 1, 16, 16>}]} {
    %c0 = arith.constant 0 : index
    %c0_0 = arith.constant 0 : index
    %c0_1 = arith.constant 0 : index
    %c0_2 = arith.constant 0 : index
    %0 = vector.load %arg1[%c0, %c0_0, %c0_1, %c0_2] : memref<1x5x5x32xbf16, #tpu.memory_space<vmem>>, vector<1x5x5x32xbf16>
    %1 = vector.shape_cast %0 : vector<1x5x5x32xbf16> to vector<5x5x32xbf16>
    %2 = vector.extract_strided_slice %1 {offsets = [0, 0, 0], sizes = [4, 4, 32], strides = [1, 1, 1]} : vector<5x5x32xbf16> to vector<4x4x32xbf16>
    %3 = vector.shape_cast %2 : vector<4x4x32xbf16> to vector<16x32xbf16>
    %4 = vector.extract_strided_slice %1 {offsets = [0, 1, 0], sizes = [4, 4, 32], strides = [1, 1, 1]} : vector<5x5x32xbf16> to vector<4x4x32xbf16>
    %5 = vector.shape_cast %4 : vector<4x4x32xbf16> to vector<16x32xbf16>
    %6 = vector.extract_strided_slice %1 {offsets = [1, 0, 0], sizes = [4, 4, 32], strides = [1, 1, 1]} : vector<5x5x32xbf16> to vector<4x4x32xbf16>
    %7 = vector.shape_cast %6 : vector<4x4x32xbf16> to vector<16x32xbf16>
    %8 = vector.extract_strided_slice %1 {offsets = [1, 1, 0], sizes = [4, 4, 32], strides = [1, 1, 1]} : vector<5x5x32xbf16> to vector<4x4x32xbf16>
    %9 = vector.shape_cast %8 : vector<4x4x32xbf16> to vector<16x32xbf16>
    %10 = tpu.concatenate %3, %5, %7, %9 in 1 : vector<16x32xbf16>, vector<16x32xbf16>, vector<16x32xbf16>, vector<16x32xbf16> -> vector<16x128xbf16>
    %c0_3 = arith.constant 0 : index
    %c0_4 = arith.constant 0 : index
    %11 = vector.load %arg2[%c0_3, %c0_4] : memref<16x128xbf16, #tpu.memory_space<vmem>>, vector<16x128xbf16>
    %cst = arith.constant dense<0.000000e+00> : vector<16x16xf32>
    %12 = tpu.matmul %11, %10, %cst {dimension_numbers = #tpu.dot_dimension_numbers<[1], [1], [0], [0], [0, 0, 1, 0], [], []>} : vector<16x128xbf16>, vector<16x128xbf16>, vector<16x16xf32> -> vector<16x16xf32>
    %c0_5 = arith.constant 0 : index
    %c0_6 = arith.constant 0 : index
    %13 = vector.load %arg3[%c0_5, %c0_6] : memref<16x1xf32, #tpu.memory_space<vmem>>, vector<16x1xf32>
    %14 = vector.broadcast %13 : vector<16x1xf32> to vector<16x16xf32>
    %15 = arith.addf %12, %14 : vector<16x16xf32>
    %16 = arith.negf %15 : vector<16x16xf32>
    %17 = math.exp %16 : vector<16x16xf32>
    %cst_7 = arith.constant 1.000000e+00 : f32
    %18 = vector.broadcast %cst_7 : f32 to vector<16x16xf32>
    %19 = arith.addf %18, %17 : vector<16x16xf32>
    %20 = arith.divf %18, %19 : vector<16x16xf32>
    %21 = arith.mulf %15, %20 : vector<16x16xf32>
    %c0_8 = arith.constant 0 : index
    %c0_9 = arith.constant 0 : index
    %c0_10 = arith.constant 0 : index
    %22 = vector.load %arg4[%c0_8, %c0_9, %c0_10] : memref<1x16x16xf32, #tpu.memory_space<vmem>>, vector<1x16x16xf32>
    %23 = vector.shape_cast %22 : vector<1x16x16xf32> to vector<16x16xf32>
    %24 = vector.shape_cast %21 : vector<16x16xf32> to vector<1x16x16xf32>
    tpu.vector_store %arg4[%c0_8, %c0_9, %c0_10], %24 {strides = array<i32>} : memref<1x16x16xf32, #tpu.memory_space<vmem>>, vector<1x16x16xf32>,
    return
  }
  func.func @transform_0(%arg0: i32) -> (i32, i32, i32, i32) {
    %c0_i32 = arith.constant 0 : i32
    %c0_i32_0 = arith.constant 0 : i32
    %c0_i32_1 = arith.constant 0 : i32
    %c0_i32_2 = arith.constant 0 : i32
    return %arg0, %c0_i32, %c0_i32_0, %c0_i32_1 : i32, i32, i32, i32
  }
  func.func @transform_1(%arg0: i32) -> (i32, i32) {
    %c0_i32 = arith.constant 0 : i32
    %c0_i32_0 = arith.constant 0 : i32
    %c0_i32_1 = arith.constant 0 : i32
    return %c0_i32, %c0_i32_0 : i32, i32
  }
  func.func @transform_2(%arg0: i32) -> (i32, i32) {
    %c0_i32 = arith.constant 0 : i32
    %c0_i32_0 = arith.constant 0 : i32
    %c0_i32_1 = arith.constant 0 : i32
    return %c0_i32, %c0_i32_0 : i32, i32
  }
  func.func @transform_3(%arg0: i32) -> (i32, i32, i32) {
    %c0_i32 = arith.constant 0 : i32
    %c0_i32_0 = arith.constant 0 : i32
    %c0_i32_1 = arith.constant 0 : i32
    return %arg0, %c0_i32, %c0_i32_0 : i32, i32, i32
  }
}

</mosaic_0001>

<llo_original>
// kernel: focus_forward.2
$region0: #{focus_forward.2}
  #allocation0 [shape = 'u32[]', space=smem, size = 0x4, offset = 0x4, fixed_abs, tag = 'smem constant byte address 0x4 - core index']
  #allocation1 [shape = 'u32[144,128]{1,0:T(1,128)}', space=vmem, size = 0x12000, scoped, tag = 'internal scratch']
  %s0 = inlined_call_operand.vmem [shape: bf16[2,10,10,16], index: 0, kind: input, shape index: {}]
  %s1 = inlined_call_operand.vmem [shape: bf16[8,144], index: 1, kind: input, shape index: {}]
  %s2 = inlined_call_operand.vmem [shape: f32[8,1], index: 2, kind: input, shape index: {}]
  %s3 = inlined_call_operand.vmem [shape: bf16[2,8,64], index: 3, kind: output, shape index: {}]
  %s4 = sld [smem:[#allocation0]]
  $region45: #{focus_forward.2} parent=0
    _
  %s6 = ssub.s32 1, %s4
  %s7 = scalar_select 0, %s6, %s4
  loop: start=0, step=1, limit=4
  $region2: #{focus_forward.2} parent=0 // loop_pre_header
    _
  $region3: #{focus_forward.2} parent=0 // loop_header
    %s9 = sphi 0, %s13
    %p10 = scmp.ge.s32.totalorder %s9, 4
    %s19 = sphi 0, %s21
    %s22 = sphi 0, %s19
    %s23 = sphi 0, %s22
    %s39 = sphi 0, %s23
    %s43 = sphi 0, %s43
    %s45 = sphi 0, %s43
    %s46 = sphi 0, %s45
    %s60 = sphi 0, %s46
    %s64 = sphi 0, %s64
    %s66 = sphi 0, %s64
    %s67 = sphi 0, %s66
    %s81 = sphi 0, %s67
    %s87 = sphi 0, %s89
    %s90 = sphi 0, %s87
    %s91 = sphi 0, %s90
    %s107 = sphi 0, %s91
  $region4: #{focus_forward.2} parent=0 // loop_header_branch
    %12 = sbr.rel (%p10) target = $region8
  $region5: #{focus_forward.2} parent=0 // loop_body
    %s14 = ssub.s32 %s9, 1
    %s15 = ssub.s32 %s9, 2
    %s16 = sadd.s32 %s9, 1
    %s17 = ssub.s32 %s9, %s16
    %p18 = scmp.eq.s32.totalorder %s17, 0
    %s20 = sadd.s32 %s19, 1
    %s21 = scalar_select %p18, %s19, %s20
    %p24 = pneg %p18
    %p25 = scmp.eq.s32.totalorder %s9, 1
    %p26 = por %p24, %p25
    %p27 = scmp.ne.s32.totalorder %s19, %s22
    %p28 = scmp.eq.s32.totalorder %s9, 0
    %p29 = por %p27, %p28
    %p30 = scmp.ne.s32.totalorder %s19, %s22
    %p31 = scmp.eq.s32.totalorder %s14, 1
    %p32 = por %p30, %p31
    %p33 = scmp.ne.s32.totalorder %s22, %s23
    %p34 = scmp.eq.s32.totalorder %s14, 0
    %p35 = por %p33, %p34
    %p36 = scmp.ne.s32.totalorder %s22, %s23
    %p37 = scmp.eq.s32.totalorder %s15, 1
    %p38 = por %p36, %p37
    %p40 = scmp.ne.s32.totalorder %s23, %s39
    %p41 = scmp.eq.s32.totalorder %s15, 0
    %p42 = por %p40, %p41
    %s44 = sadd.s32 %s43, 1
    %p47 = scmp.eq.s32.totalorder %s9, 1
    %p48 = scmp.ne.s32.totalorder %s43, %s45
    %p49 = scmp.eq.s32.totalorder %s9, 0
    %p50 = por %p48, %p49
    %p51 = scmp.ne.s32.totalorder %s43, %s45
    %p52 = scmp.eq.s32.totalorder %s14, 1
    %p53 = por %p51, %p52
    %p54 = scmp.ne.s32.totalorder %s45, %s46
    %p55 = scmp.eq.s32.totalorder %s14, 0
    %p56 = por %p54, %p55
    %p57 = scmp.ne.s32.totalorder %s45, %s46
    %p58 = scmp.eq.s32.totalorder %s15, 1
    %p59 = por %p57, %p58
    %p61 = scmp.ne.s32.totalorder %s46, %s60
    %p62 = scmp.eq.s32.totalorder %s15, 0
    %p63 = por %p61, %p62
    %s65 = sadd.s32 %s64, 1
    %p68 = scmp.eq.s32.totalorder %s9, 1
    %p69 = scmp.ne.s32.totalorder %s64, %s66
    %p70 = scmp.eq.s32.totalorder %s9, 0
    %p71 = por %p69, %p70
    %p72 = scmp.ne.s32.totalorder %s64, %s66
    %p73 = scmp.eq.s32.totalorder %s14, 1
    %p74 = por %p72, %p73
    %p75 = scmp.ne.s32.totalorder %s66, %s67
    %p76 = scmp.eq.s32.totalorder %s14, 0
    %p77 = por %p75, %p76
    %p78 = scmp.ne.s32.totalorder %s66, %s67
    %p79 = scmp.eq.s32.totalorder %s15, 1
    %p80 = por %p78, %p79
    %p82 = scmp.ne.s32.totalorder %s67, %s81
    %p83 = scmp.eq.s32.totalorder %s15, 0
    %p84 = por %p82, %p83
    %s85 = ssub.s32 %s9, %s16
    %p86 = scmp.eq.s32.totalorder %s85, 0
    %s88 = sadd.s32 %s87, 1
    %s89 = scalar_select %p86, %s87, %s88
    %p92 = pneg %p86
    %p93 = scmp.eq.s32.totalorder %s9, 1
    %p94 = por %p92, %p93
    %p95 = scmp.ne.s32.totalorder %s87, %s90
    %p96 = scmp.eq.s32.totalorder %s9, 0
    %p97 = por %p95, %p96
    %p98 = scmp.ne.s32.totalorder %s87, %s90
    %p99 = scmp.eq.s32.totalorder %s14, 1
    %p100 = por %p98, %p99
    %p101 = scmp.ne.s32.totalorder %s90, %s91
    %p102 = scmp.eq.s32.totalorder %s14, 0
    %p103 = por %p101, %p102
    %p104 = scmp.ne.s32.totalorder %s90, %s91
    %p105 = scmp.eq.s32.totalorder %s15, 1
    %p106 = por %p104, %p105
    %p108 = scmp.ne.s32.totalorder %s91, %s107
    %p109 = scmp.eq.s32.totalorder %s15, 0
    %p110 = por %p108, %p109
    %p111 = scmp.le.s32.totalorder 1, %s9
    %p112 = scmp.lt.s32.totalorder %s9, 3
    %p113 = pnand %p111, %p112
    %p114 = pneg %p113
    // Predicated region
    $region9: #{focus_forward.2} parent=5 // pred_check
      _
    $region10: #{focus_forward.2} parent=5 // pred_check_branch
      %116 = sbr.rel (%p113) target = $region12
    $region11: #{focus_forward.2} parent=5 // pred_region
      %s117 = ssub.s32 %s9, 1
      // Predicated region
      $region13: #{focus_forward.2} parent=11 // pred_check
        %p118 = pneg %p56
      $region14: #{focus_forward.2} parent=11 // pred_check_branch
        %120 = sbr.rel (%p118) target = $region16
      $region15: #{focus_forward.2} parent=11 // pred_region
        _
      $region16: #{focus_forward.2} parent=11 // pred_fallthru
        _
      // Predicated region
      $region17: #{focus_forward.2} parent=11 // pred_check
        %p121 = pneg %p77
      $region18: #{focus_forward.2} parent=11 // pred_check_branch
        %123 = sbr.rel (%p121) target = $region20
      $region19: #{focus_forward.2} parent=11 // pred_region
        _
      $region20: #{focus_forward.2} parent=11 // pred_fallthru
        _
    $region12: #{focus_forward.2} parent=5 // pred_fallthru
      _
    %p124 = scmp.lt.s32.totalorder %s9, 2
    // Predicated region
    $region21: #{focus_forward.2} parent=5 // pred_check
      %p125 = pneg %p124
    $region22: #{focus_forward.2} parent=5 // pred_check_branch
      %127 = sbr.rel (%p125) target = $region24
    $region23: #{focus_forward.2} parent=5 // pred_region
      // Predicated region
      $region25: #{focus_forward.2} parent=23 // pred_check
        %p128 = pneg %p29
      $region26: #{focus_forward.2} parent=23 // pred_check_branch
        %130 = sbr.rel (%p128) target = $region28
      $region27: #{focus_forward.2} parent=23 // pred_region
        %p131 = scmp.lt.s32.totalorder %s9, 1
        %s132 = scalar_select %p131, %s9, 1
        %s133 = smul.addr %s132, 20
        %s134 = smul.addr %s133, 4
        %s135 = scalar_lea.vmem %s0, %s134
      $region28: #{focus_forward.2} parent=23 // pred_fallthru
        _
    $region24: #{focus_forward.2} parent=5 // pred_fallthru
      _
    %p136 = scmp.le.s32.totalorder 1, %s9
    %p137 = scmp.lt.s32.totalorder %s9, 3
    %p138 = pnand %p136, %p137
    %p139 = pneg %p138
    // Predicated region
    $region29: #{focus_forward.2} parent=5 // pred_check
      _
    $region30: #{focus_forward.2} parent=5 // pred_check_branch
      %141 = sbr.rel (%p138) target = $region32
    $region31: #{focus_forward.2} parent=5 // pred_region
      %s142 = ssub.s32 %s9, 1
      %p143 = scmp.lt.s32.totalorder %s14, 1
      %s144 = scalar_select %p143, %s14, 1
      %s145 = smul.addr %s144, 20
      %s146 = smul.addr %s145, 4
      %s147 = scalar_lea.vmem %s0, %s146
      %p148 = pneg %p35
      %p149 = pneg %p32
      %p150 = pneg %p56
      %p151 = pneg %p53
      %p152 = pneg %p77
      %p153 = pneg %p74
      %p154 = pneg %p103
      %p155 = pneg %p100
      %p156 = scmp.lt.s32.totalorder %s14, 1
      %s157 = scalar_select %p156, %s14, 1
      %s158 = smul.addr %s157, 4
      %s159 = scalar_lea.vmem %s3, %s158
      %p160 = scmp.lt.s32.totalorder %s14, 1
      %s161 = scalar_select %p160, %s14, 1
      %s162 = smul.addr %s161, 20
      %s163 = smul.addr %s162, 4
      %s164 = scalar_lea.vmem %s0, %s163
      %p165 = scmp.lt.s32.totalorder %s14, 1
      %s166 = scalar_select %p165, %s14, 1
      %s167 = smul.addr %s166, 4
      %s168 = scalar_lea.vmem %s3, %s167
      %v170 = vld [vmem:[%s164] sm:$0xf]
      %v171 = vld [vmem:[%s164 + $0x4] sm:$0x1]
      %v172 = vld [vmem:[%s164 + $0x8] sm:$0xf]
      %v173 = vld [vmem:[%s164 + $0xc] sm:$0x1]
      %v174 = vld [vmem:[%s164 + $0x10] sm:$0xf]
      %v175 = vld [vmem:[%s164 + $0x14] sm:$0x1]
      %v176 = vld [vmem:[%s164 + $0x18] sm:$0xf]
      %v177 = vld [vmem:[%s164 + $0x1c] sm:$0x1]
      %v178 = vld [vmem:[%s164 + $0x20] sm:$0xf]
      %v179 = vld [vmem:[%s164 + $0x24] sm:$0x1]
      %v180 = vld [vmem:[%s164 + $0x28] sm:$0xf]
      %v181 = vld [vmem:[%s164 + $0x2c] sm:$0x1]
      %v182 = vld [vmem:[%s164 + $0x30] sm:$0xf]
      %v183 = vld [vmem:[%s164 + $0x34] sm:$0x1]
      %v184 = vld [vmem:[%s164 + $0x38] sm:$0xf]
      %v185 = vld [vmem:[%s164 + $0x3c] sm:$0x1]
      %v186 = vld [vmem:[%s164 + $0x40] sm:$0xf]
      %v187 = vld [vmem:[%s164 + $0x44] sm:$0x1]
      %v188 = vld [vmem:[%s164 + $0x48] sm:$0xf]
      %v189 = vld [vmem:[%s164 + $0x4c] sm:$0x1]
      %vm190 = vsmask.f32 3328
      %vm191 = vsmask.f32 7440
      %vm192 = vmor %vm190, %vm191
      %v194 = vshrl.u32 %v170, 16
      %v196 = vrot.slane %v194, 4
      %v197 = vshll.u32 %v170, 16
      %v199 = vrot.slane %v197, 5
      %v200 = vor.u32 %v196, %v199
      %v201 = vrot.slane %v200, 4
      %v203 = vshll.u32 %v171, 16
      %v205 = vrot.slane %v203, 5
      %v206 = vsel %vm192, %v201, %v205
      %v208 = vshrl.u32 %v172, 16
      %v210 = vrot.slane %v208, 4
      %v211 = vshll.u32 %v172, 16
      %v213 = vrot.slane %v211, 5
      %v214 = vor.u32 %v210, %v213
      %v215 = vrot.slane %v214, 4
      %v217 = vshll.u32 %v173, 16
      %v219 = vrot.slane %v217, 5
      %v220 = vsel %vm192, %v215, %v219
      %v222 = vshrl.u32 %v174, 16
      %v224 = vrot.slane %v222, 4
      %v225 = vshll.u32 %v174, 16
      %v227 = vrot.slane %v225, 5
      %v228 = vor.u32 %v224, %v227
      %v229 = vrot.slane %v228, 4
      %v231 = vshll.u32 %v175, 16
      %v233 = vrot.slane %v231, 5
      %v234 = vsel %vm192, %v229, %v233
      %v236 = vshrl.u32 %v176, 16
      %v238 = vrot.slane %v236, 4
      %v239 = vshll.u32 %v176, 16
      %v241 = vrot.slane %v239, 5
      %v242 = vor.u32 %v238, %v241
      %v243 = vrot.slane %v242, 4
      %v245 = vshll.u32 %v177, 16
      %v247 = vrot.slane %v245, 5
      %v248 = vsel %vm192, %v243, %v247
      %v250 = vshrl.u32 %v178, 16
      %v252 = vrot.slane %v250, 4
      %v253 = vshll.u32 %v178, 16
      %v255 = vrot.slane %v253, 5
      %v256 = vor.u32 %v252, %v255
      %v257 = vrot.slane %v256, 4
      %v259 = vshll.u32 %v179, 16
      %v261 = vrot.slane %v259, 5
      %v262 = vsel %vm192, %v257, %v261
      %v264 = vshrl.u32 %v180, 16
      %v266 = vrot.slane %v264, 4
      %v267 = vshll.u32 %v180, 16
      %v269 = vrot.slane %v267, 5
      %v270 = vor.u32 %v266, %v269
      %v271 = vrot.slane %v270, 4
      %v273 = vshll.u32 %v181, 16
      %v275 = vrot.slane %v273, 5
      %v276 = vsel %vm192, %v271, %v275
      %v278 = vshrl.u32 %v182, 16
      %v280 = vrot.slane %v278, 4
      %v281 = vshll.u32 %v182, 16
      %v283 = vrot.slane %v281, 5
      %v284 = vor.u32 %v280, %v283
      %v285 = vrot.slane %v284, 4
      %v287 = vshll.u32 %v183, 16
      %v289 = vrot.slane %v287, 5
      %v290 = vsel %vm192, %v285, %v289
      %v292 = vshrl.u32 %v184, 16
      %v294 = vrot.slane %v292, 4
      %v295 = vshll.u32 %v184, 16
      %v297 = vrot.slane %v295, 5
      %v298 = vor.u32 %v294, %v297
      %v299 = vrot.slane %v298, 4
      %v301 = vshll.u32 %v185, 16
      %v303 = vrot.slane %v301, 5
      %v304 = vsel %vm192, %v299, %v303
      %vm321 = vcmask 1042432
      %vm322 = vcmask 1046532
      %vm323 = vmor %vm321, %vm322
      %v324 = vrot.slane %v170, 5
      %v325 = vrot.slane %v324, 4
      %v326 = vrot.slane %v171, 5
      %v327 = vsel %vm323, %v325, %v326
      %v328 = vrot.slane %v172, 5
      %v329 = vrot.slane %v328, 4
      %v330 = vrot.slane %v173, 5
      %v331 = vsel %vm323, %v329, %v330
      %v332 = vrot.slane %v174, 5
      %v333 = vrot.slane %v332, 4
      %v334 = vrot.slane %v175, 5
      %v335 = vsel %vm323, %v333, %v334
      %v336 = vrot.slane %v176, 5
      %v337 = vrot.slane %v336, 4
      %v338 = vrot.slane %v177, 5
      %v339 = vsel %vm323, %v337, %v338
      %v340 = vrot.slane %v178, 5
      %v341 = vrot.slane %v340, 4
      %v342 = vrot.slane %v179, 5
      %v343 = vsel %vm323, %v341, %v342
      %v344 = vrot.slane %v180, 5
      %v345 = vrot.slane %v344, 4
      %v346 = vrot.slane %v181, 5
      %v347 = vsel %vm323, %v345, %v346
      %v348 = vrot.slane %v182, 5
      %v349 = vrot.slane %v348, 4
      %v350 = vrot.slane %v183, 5
      %v351 = vsel %vm323, %v349, %v350
      %v352 = vrot.slane %v184, 5
      %v353 = vrot.slane %v352, 4
      %v354 = vrot.slane %v185, 5
      %v355 = vsel %vm323, %v353, %v354
      %v357 = vshrl.u32 %v186, 16
      %v359 = vrot.slane %v357, 4
      %v360 = vshll.u32 %v186, 16
      %v362 = vrot.slane %v360, 5
      %v363 = vor.u32 %v359, %v362
      %v364 = vrot.slane %v363, 4
      %v366 = vshll.u32 %v187, 16
      %v368 = vrot.slane %v366, 5
      %v369 = vsel %vm192, %v364, %v368
      %v372 = vrot.slane %v186, 5
      %v373 = vrot.slane %v372, 4
      %v374 = vrot.slane %v187, 5
      %v375 = vsel %vm323, %v373, %v374
      %v377 = vshrl.u32 %v188, 16
      %v379 = vrot.slane %v377, 4
      %v380 = vshll.u32 %v188, 16
      %v382 = vrot.slane %v380, 5
      %v383 = vor.u32 %v379, %v382
      %v384 = vrot.slane %v383, 4
      %v386 = vshll.u32 %v189, 16
      %v388 = vrot.slane %v386, 5
      %v389 = vsel %vm192, %v384, %v388
      %v392 = vrot.slane %v188, 5
      %v393 = vrot.slane %v392, 4
      %v394 = vrot.slane %v189, 5
      %v395 = vsel %vm323, %v393, %v394
      %v396 = vunpack.c.l.b16 %v170
      %v397 = vunpack.c.l.b16 %v172
      %v398 = vunpack.c.l.b16 %v174
      %v399 = vunpack.c.l.b16 %v176
      %v400 = vunpack.c.l.b16 %v178
      %v401 = vunpack.c.l.b16 %v180
      %v402 = vunpack.c.l.b16 %v182
      %v403 = vunpack.c.l.b16 %v184
      %v404 = vpack.c.b16 %v397, %v396
      %v405 = vpack.c.b16 %v399, %v398
      %v406 = vpack.c.b16 %v401, %v400
      %v407 = vpack.c.b16 %v403, %v402
      %v408 = vunpack.c.l.b16 %v206
      %v409 = vunpack.c.l.b16 %v220
      %v410 = vunpack.c.l.b16 %v234
      %v411 = vunpack.c.l.b16 %v248
      %v412 = vunpack.c.l.b16 %v262
      %v413 = vunpack.c.l.b16 %v276
      %v414 = vunpack.c.l.b16 %v290
      %v415 = vunpack.c.l.b16 %v304
      %v416 = vpack.c.b16 %v409, %v408
      %v417 = vpack.c.b16 %v411, %v410
      %v418 = vpack.c.b16 %v413, %v412
      %v419 = vpack.c.b16 %v415, %v414
      %420 = vrot.lane.b32.xlu0 %v416, 16
      %v421 = vpop.permute.xlu0 %420
      %422 = vrot.lane.b32.xlu0 %v417, 16
      %v423 = vpop.permute.xlu0 %422
      %424 = vrot.lane.b32.xlu0 %v418, 16
      %v425 = vpop.permute.xlu0 %424
      %426 = vrot.lane.b32.xlu0 %v419, 16
      %v427 = vpop.permute.xlu0 %426
      %v428 = vunpack.c.l.b16 %v327
      %v429 = vunpack.c.l.b16 %v331
      %v430 = vunpack.c.l.b16 %v335
      %v431 = vunpack.c.l.b16 %v339
      %v432 = vunpack.c.l.b16 %v343
      %v433 = vunpack.c.l.b16 %v347
      %v434 = vunpack.c.l.b16 %v351
      %v435 = vunpack.c.l.b16 %v355
      %v436 = vpack.c.b16 %v429, %v428
      %v437 = vpack.c.b16 %v431, %v430
      %v438 = vpack.c.b16 %v433, %v432
      %v439 = vpack.c.b16 %v435, %v434
      %440 = vrot.lane.b32.xlu0 %v436, 32
      %v441 = vpop.permute.xlu0 %440
      %442 = vrot.lane.b32.xlu0 %v437, 32
      %v443 = vpop.permute.xlu0 %442
      %444 = vrot.lane.b32.xlu0 %v438, 32
      %v445 = vpop.permute.xlu0 %444
      %446 = vrot.lane.b32.xlu0 %v439, 32
      %v447 = vpop.permute.xlu0 %446
      %v448 = vunpack.c.l.b16 %v186
      %v449 = vpack.c.b16 %v398, %v397
      %v450 = vpack.c.b16 %v400, %v399
      %v451 = vpack.c.b16 %v402, %v401
      %v452 = vpack.c.b16 %v448, %v403
      %453 = vrot.lane.b32.xlu0 %v449, 48
      %v454 = vpop.permute.xlu0 %453
      %455 = vrot.lane.b32.xlu0 %v450, 48
      %v456 = vpop.permute.xlu0 %455
      %457 = vrot.lane.b32.xlu0 %v451, 48
      %v458 = vpop.permute.xlu0 %457
      %459 = vrot.lane.b32.xlu0 %v452, 48
      %v460 = vpop.permute.xlu0 %459
      %v461 = vunpack.c.l.b16 %v369
      %v462 = vpack.c.b16 %v410, %v409
      %v463 = vpack.c.b16 %v412, %v411
      %v464 = vpack.c.b16 %v414, %v413
      %v465 = vpack.c.b16 %v461, %v415
      %466 = vrot.lane.b32.xlu0 %v462, 64
      %v467 = vpop.permute.xlu0 %466
      %468 = vrot.lane.b32.xlu0 %v463, 64
      %v469 = vpop.permute.xlu0 %468
      %470 = vrot.lane.b32.xlu0 %v464, 64
      %v471 = vpop.permute.xlu0 %470
      %472 = vrot.lane.b32.xlu0 %v465, 64
      %v473 = vpop.permute.xlu0 %472
      %v474 = vunpack.c.l.b16 %v375
      %v475 = vpack.c.b16 %v430, %v429
      %v476 = vpack.c.b16 %v432, %v431
      %v477 = vpack.c.b16 %v434, %v433
      %v478 = vpack.c.b16 %v474, %v435
      %479 = vrot.lane.b32.xlu0 %v475, 80
      %v480 = vpop.permute.xlu0 %479
      %481 = vrot.lane.b32.xlu0 %v476, 80
      %v482 = vpop.permute.xlu0 %481
      %483 = vrot.lane.b32.xlu0 %v477, 80
      %v484 = vpop.permute.xlu0 %483
      %485 = vrot.lane.b32.xlu0 %v478, 80
      %v486 = vpop.permute.xlu0 %485
      %v487 = vunpack.c.l.b16 %v188
      %v488 = vpack.c.b16 %v487, %v448
      %489 = vrot.lane.b32.xlu0 %v405, 96
      %v490 = vpop.permute.xlu0 %489
      %491 = vrot.lane.b32.xlu0 %v406, 96
      %v492 = vpop.permute.xlu0 %491
      %493 = vrot.lane.b32.xlu0 %v407, 96
      %v494 = vpop.permute.xlu0 %493
      %495 = vrot.lane.b32.xlu0 %v488, 96
      %v496 = vpop.permute.xlu0 %495
      %v497 = vunpack.c.l.b16 %v389
      %v498 = vpack.c.b16 %v497, %v461
      %499 = vrot.lane.b32.xlu0 %v417, 112
      %v500 = vpop.permute.xlu0 %499
      %501 = vrot.lane.b32.xlu0 %v418, 112
      %v502 = vpop.permute.xlu0 %501
      %503 = vrot.lane.b32.xlu0 %v419, 112
      %v504 = vpop.permute.xlu0 %503
      %505 = vrot.lane.b32.xlu0 %v498, 112
      %v506 = vpop.permute.xlu0 %505
      %v507 = vunpack.c.l.b16 %v395
      %v508 = vpack.c.b16 %v507, %v474
      %vm509 = vcmask 130048
      %v512 = vsel %vm509, %v404, %v421
      %v515 = vsel %vm509, %v405, %v423
      %v518 = vsel %vm509, %v406, %v425
      %v521 = vsel %vm509, %v407, %v427
      %vm522 = vcmask 261120
      %v524 = vsel %vm522, %v512, %v441
      %v526 = vsel %vm522, %v515, %v443
      %v528 = vsel %vm522, %v518, %v445
      %v530 = vsel %vm522, %v521, %v447
      %vm531 = vcmask 392192
      %v533 = vsel %vm531, %v524, %v454
      %v535 = vsel %vm531, %v526, %v456
      %v537 = vsel %vm531, %v528, %v458
      %v539 = vsel %vm531, %v530, %v460
      %vm540 = vcmask 523264
      %v542 = vsel %vm540, %v533, %v467
      %v544 = vsel %vm540, %v535, %v469
      %v546 = vsel %vm540, %v537, %v471
      %v548 = vsel %vm540, %v539, %v473
      %vm549 = vcmask 654336
      %v551 = vsel %vm549, %v542, %v480
      %v553 = vsel %vm549, %v544, %v482
      %v555 = vsel %vm549, %v546, %v484
      %v557 = vsel %vm549, %v548, %v486
      %vm558 = vcmask 785408
      %v560 = vsel %vm558, %v551, %v490
      %v562 = vsel %vm558, %v553, %v492
      %v564 = vsel %vm558, %v555, %v494
      %v566 = vsel %vm558, %v557, %v496
      %vm567 = vcmask 916480
      %v569 = vsel %vm567, %v560, %v500
      %v572 = vsel %vm567, %v562, %v502
      %v575 = vsel %vm567, %v564, %v504
      %v578 = vsel %vm567, %v566, %v506
      %v580 = vld [vmem:[%s1] sm:$0xff]
      %v581 = vld [vmem:[%s2] sm:$0xff]
      %583 = vset.pattern.permute.xlu0 0
      %584 = vperm.xlu0 %583, %v581
      %v585 = vpop.permute.xlu0 %584
      %v588 = vunpack.c.l.b16 %v580
      %v589 = vunpack.c.h.b16 %v580
      %v590 = vpack.c.b16 %v588, %v588
      %v591 = vpack.c.b16 %v589, %v589
      %v594 = vsel %vm509, %v591, 0
      %v597 = vsel %vm509, %v437, 0
      %v600 = vsel %vm509, %v438, 0
      %v603 = vsel %vm509, %v439, 0
      %v606 = vsel %vm509, %v508, 0
      %608 = vmatprep.subr.bf16.mxu0 %v597
      %609 = vmatpush1.bf16.xpose.msra.mxu0 %v569
      %610 = vmatprep.subr.bf16.mxu0 %v600
      %611 = vmatpush1.bf16.xpose.msra.mxu0 %v572
      %612 = vmatprep.subr.bf16.mxu0 %v603
      %613 = vmatpush1.bf16.xpose.msra.mxu0 %v575
      %614 = vmatprep.subr.bf16.mxu0 %v606
      %615 = vmatpush1.bf16.xpose.msra.mxu0 %v578
      %616 = vmatprep.subr.bf16.mxu0 0
      %617 = vmatpush1.bf16.xpose.msra.mxu0 0
      %618 = vmatprep.subr.bf16.mxu0 0
      %619 = vmatpush1.bf16.xpose.msra.mxu0 0
      %620 = vmatprep.subr.bf16.mxu0 0
      %621 = vmatpush1.bf16.xpose.msra.mxu0 0
      %622 = vmatprep.subr.bf16.mxu0 0
      %623 = vmatpush1.bf16.xpose.msra.mxu0 0
      %624 = vmatprep.subr.bf16.mxu0 0
      %625 = vmatpush1.bf16.xpose.msra.mxu0 0
      %626 = vmatprep.subr.bf16.mxu0 0
      %627 = vmatpush1.bf16.xpose.msra.mxu0 0
      %628 = vmatprep.subr.bf16.mxu0 0
      %629 = vmatpush1.bf16.xpose.msra.mxu0 0
      %630 = vmatprep.subr.bf16.mxu0 0
      %631 = vmatpush1.bf16.xpose.msra.mxu0 0
      %632 = vmatprep.subr.bf16.mxu0 0
      %633 = vmatpush1.bf16.xpose.msra.mxu0 0
      %634 = vmatprep.subr.bf16.mxu0 0
      %635 = vmatpush1.bf16.xpose.msra.mxu0 0
      %636 = vmatprep.subr.bf16.mxu0 0
      %637 = vmatpush1.bf16.xpose.msra.mxu0 0
      %638 = vmatprep.subr.bf16.mxu0 0
      %639 = vmatpush1.bf16.xpose.msra.mxu0 0
      %640 = vmatprep.mubr.bf16.mxu0 %v594
      %641 = vmatmul.mubr.bf16.gmra.mrb[0].mxu0 %v590
      %v642 = vpop.f32.mrb[0].mxu0
      %v643 = vadd.f32 %v585, %v642
      %v644 = vpop.f32.mrb[0].mxu0
      %v645 = vpop.f32.mrb[0].mxu0
      %v646 = vpop.f32.mrb[0].mxu0
      %647 = vdwg.mxu0
      %v648 = vxor.u32 %v643, 2147483648
      %v649 = vmul.f32 %v648, 1.442695
      %v650 = vpow.pop %v649
      %v651 = vadd.f32 %v650, 1.0
      %v652 = vrcp.pop %v651
      %v653 = vmul.f32 1.0, %v652
      %v654 = vmul.f32 %v643, %v653
      %v655 = vpack.c.bf16 %v654, %v654
      %vm656 = vcmask 519168
      %657 = vst.msk [vmem:[%s168] sm:$0xf] %vm656, %v655
      %p658 = scmp.lt.s32.totalorder %s14, 1
      %s659 = scalar_select %p658, %s14, 1
      %s660 = smul.addr %s659, 4
      %s661 = scalar_lea.vmem %s3, %s660
      // Predicated region
      $region33: #{focus_forward.2} parent=31 // pred_check
        %p662 = pneg %p100
      $region34: #{focus_forward.2} parent=31 // pred_check_branch
        %664 = sbr.rel (%p662) target = $region36
      $region35: #{focus_forward.2} parent=31 // pred_region
        _
      $region36: #{focus_forward.2} parent=31 // pred_fallthru
        _
    $region32: #{focus_forward.2} parent=5 // pred_fallthru
      _
    %p665 = scmp.le.s32.totalorder 2, %s9
    // Predicated region
    $region37: #{focus_forward.2} parent=5 // pred_check
      %p666 = pneg %p665
    $region38: #{focus_forward.2} parent=5 // pred_check_branch
      %668 = sbr.rel (%p666) target = $region40
    $region39: #{focus_forward.2} parent=5 // pred_region
      %s669 = ssub.s32 %s9, 2
      // Predicated region
      $region41: #{focus_forward.2} parent=39 // pred_check
        %p670 = pneg %p106
      $region42: #{focus_forward.2} parent=39 // pred_check_branch
        %672 = sbr.rel (%p670) target = $region44
      $region43: #{focus_forward.2} parent=39 // pred_region
        %p673 = scmp.lt.s32.totalorder %s15, 1
        %s674 = scalar_select %p673, %s15, 1
        %s675 = smul.addr %s674, 4
        %s676 = scalar_lea.vmem %s3, %s675
      $region44: #{focus_forward.2} parent=39 // pred_fallthru
        _
    $region40: #{focus_forward.2} parent=5 // pred_fallthru
      _
  $region6: #{focus_forward.2} parent=0 // loop_footer
    %s13 = sadd.s32 1, %s9
  $region7: #{focus_forward.2} parent=0 // loop_footer_branch
    %8 = sbr.rel target = $region3
  $region8: #{focus_forward.2} parent=0 // loop_exit
    _

// kernel: focus_forward.3
$region0: #{focus_forward.3}
  #allocation0 [shape = 'u32[]', space=smem, size = 0x4, offset = 0x4, fixed_abs, tag = 'smem constant byte address 0x4 - core index']
  #allocation1 [shape = 'u32[144,128]{1,0:T(1,128)}', space=vmem, size = 0x12000, scoped, tag = 'internal scratch']
  %s0 = inlined_call_operand.vmem [shape: bf16[2,5,5,32], index: 0, kind: input, shape index: {}]
  %s1 = inlined_call_operand.vmem [shape: bf16[16,128], index: 1, kind: input, shape index: {}]
  %s2 = inlined_call_operand.vmem [shape: f32[16,1], index: 2, kind: input, shape index: {}]
  %s3 = inlined_call_operand.vmem [shape: f32[2,16,16], index: 3, kind: output, shape index: {}]
  %s4 = sld [smem:[#allocation0]]
  $region45: #{focus_forward.3} parent=0
    _
  %s6 = ssub.s32 1, %s4
  %s7 = scalar_select 0, %s6, %s4
  loop: start=0, step=1, limit=4
  $region2: #{focus_forward.3} parent=0 // loop_pre_header
    _
  $region3: #{focus_forward.3} parent=0 // loop_header
    %s9 = sphi 0, %s13
    %p10 = scmp.ge.s32.totalorder %s9, 4
    %s19 = sphi 0, %s21
    %s22 = sphi 0, %s19
    %s23 = sphi 0, %s22
    %s39 = sphi 0, %s23
    %s43 = sphi 0, %s43
    %s45 = sphi 0, %s43
    %s46 = sphi 0, %s45
    %s60 = sphi 0, %s46
    %s64 = sphi 0, %s64
    %s66 = sphi 0, %s64
    %s67 = sphi 0, %s66
    %s81 = sphi 0, %s67
    %s87 = sphi 0, %s89
    %s90 = sphi 0, %s87
    %s91 = sphi 0, %s90
    %s107 = sphi 0, %s91
  $region4: #{focus_forward.3} parent=0 // loop_header_branch
    %12 = sbr.rel (%p10) target = $region8
  $region5: #{focus_forward.3} parent=0 // loop_body
    %s14 = ssub.s32 %s9, 1
    %s15 = ssub.s32 %s9, 2
    %s16 = sadd.s32 %s9, 1
    %s17 = ssub.s32 %s9, %s16
    %p18 = scmp.eq.s32.totalorder %s17, 0
    %s20 = sadd.s32 %s19, 1
    %s21 = scalar_select %p18, %s19, %s20
    %p24 = pneg %p18
    %p25 = scmp.eq.s32.totalorder %s9, 1
    %p26 = por %p24, %p25
    %p27 = scmp.ne.s32.totalorder %s19, %s22
    %p28 = scmp.eq.s32.totalorder %s9, 0
    %p29 = por %p27, %p28
    %p30 = scmp.ne.s32.totalorder %s19, %s22
    %p31 = scmp.eq.s32.totalorder %s14, 1
    %p32 = por %p30, %p31
    %p33 = scmp.ne.s32.totalorder %s22, %s23
    %p34 = scmp.eq.s32.totalorder %s14, 0
    %p35 = por %p33, %p34
    %p36 = scmp.ne.s32.totalorder %s22, %s23
    %p37 = scmp.eq.s32.totalorder %s15, 1
    %p38 = por %p36, %p37
    %p40 = scmp.ne.s32.totalorder %s23, %s39
    %p41 = scmp.eq.s32.totalorder %s15, 0
    %p42 = por %p40, %p41
    %s44 = sadd.s32 %s43, 1
    %p47 = scmp.eq.s32.totalorder %s9, 1
    %p48 = scmp.ne.s32.totalorder %s43, %s45
    %p49 = scmp.eq.s32.totalorder %s9, 0
    %p50 = por %p48, %p49
    %p51 = scmp.ne.s32.totalorder %s43, %s45
    %p52 = scmp.eq.s32.totalorder %s14, 1
    %p53 = por %p51, %p52
    %p54 = scmp.ne.s32.totalorder %s45, %s46
    %p55 = scmp.eq.s32.totalorder %s14, 0
    %p56 = por %p54, %p55
    %p57 = scmp.ne.s32.totalorder %s45, %s46
    %p58 = scmp.eq.s32.totalorder %s15, 1
    %p59 = por %p57, %p58
    %p61 = scmp.ne.s32.totalorder %s46, %s60
    %p62 = scmp.eq.s32.totalorder %s15, 0
    %p63 = por %p61, %p62
    %s65 = sadd.s32 %s64, 1
    %p68 = scmp.eq.s32.totalorder %s9, 1
    %p69 = scmp.ne.s32.totalorder %s64, %s66
    %p70 = scmp.eq.s32.totalorder %s9, 0
    %p71 = por %p69, %p70
    %p72 = scmp.ne.s32.totalorder %s64, %s66
    %p73 = scmp.eq.s32.totalorder %s14, 1
    %p74 = por %p72, %p73
    %p75 = scmp.ne.s32.totalorder %s66, %s67
    %p76 = scmp.eq.s32.totalorder %s14, 0
    %p77 = por %p75, %p76
    %p78 = scmp.ne.s32.totalorder %s66, %s67
    %p79 = scmp.eq.s32.totalorder %s15, 1
    %p80 = por %p78, %p79
    %p82 = scmp.ne.s32.totalorder %s67, %s81
    %p83 = scmp.eq.s32.totalorder %s15, 0
    %p84 = por %p82, %p83
    %s85 = ssub.s32 %s9, %s16
    %p86 = scmp.eq.s32.totalorder %s85, 0
    %s88 = sadd.s32 %s87, 1
    %s89 = scalar_select %p86, %s87, %s88
    %p92 = pneg %p86
    %p93 = scmp.eq.s32.totalorder %s9, 1
    %p94 = por %p92, %p93
    %p95 = scmp.ne.s32.totalorder %s87, %s90
    %p96 = scmp.eq.s32.totalorder %s9, 0
    %p97 = por %p95, %p96
    %p98 = scmp.ne.s32.totalorder %s87, %s90
    %p99 = scmp.eq.s32.totalorder %s14, 1
    %p100 = por %p98, %p99
    %p101 = scmp.ne.s32.totalorder %s90, %s91
    %p102 = scmp.eq.s32.totalorder %s14, 0
    %p103 = por %p101, %p102
    %p104 = scmp.ne.s32.totalorder %s90, %s91
    %p105 = scmp.eq.s32.totalorder %s15, 1
    %p106 = por %p104, %p105
    %p108 = scmp.ne.s32.totalorder %s91, %s107
    %p109 = scmp.eq.s32.totalorder %s15, 0
    %p110 = por %p108, %p109
    %p111 = scmp.le.s32.totalorder 1, %s9
    %p112 = scmp.lt.s32.totalorder %s9, 3
    %p113 = pnand %p111, %p112
    %p114 = pneg %p113
    // Predicated region
    $region9: #{focus_forward.3} parent=5 // pred_check
      _
    $region10: #{focus_forward.3} parent=5 // pred_check_branch
      %116 = sbr.rel (%p113) target = $region12
    $region11: #{focus_forward.3} parent=5 // pred_region
      %s117 = ssub.s32 %s9, 1
      // Predicated region
      $region13: #{focus_forward.3} parent=11 // pred_check
        %p118 = pneg %p56
      $region14: #{focus_forward.3} parent=11 // pred_check_branch
        %120 = sbr.rel (%p118) target = $region16
      $region15: #{focus_forward.3} parent=11 // pred_region
        _
      $region16: #{focus_forward.3} parent=11 // pred_fallthru
        _
      // Predicated region
      $region17: #{focus_forward.3} parent=11 // pred_check
        %p121 = pneg %p77
      $region18: #{focus_forward.3} parent=11 // pred_check_branch
        %123 = sbr.rel (%p121) target = $region20
      $region19: #{focus_forward.3} parent=11 // pred_region
        _
      $region20: #{focus_forward.3} parent=11 // pred_fallthru
        _
    $region12: #{focus_forward.3} parent=5 // pred_fallthru
      _
    %p124 = scmp.lt.s32.totalorder %s9, 2
    // Predicated region
    $region21: #{focus_forward.3} parent=5 // pred_check
      %p125 = pneg %p124
    $region22: #{focus_forward.3} parent=5 // pred_check_branch
      %127 = sbr.rel (%p125) target = $region24
    $region23: #{focus_forward.3} parent=5 // pred_region
      // Predicated region
      $region25: #{focus_forward.3} parent=23 // pred_check
        %p128 = pneg %p29
      $region26: #{focus_forward.3} parent=23 // pred_check_branch
        %130 = sbr.rel (%p128) target = $region28
      $region27: #{focus_forward.3} parent=23 // pred_region
        %p131 = scmp.lt.s32.totalorder %s9, 1
        %s132 = scalar_select %p131, %s9, 1
        %s133 = smul.addr %s132, 5
        %s134 = smul.addr %s133, 4
        %s135 = scalar_lea.vmem %s0, %s134
      $region28: #{focus_forward.3} parent=23 // pred_fallthru
        _
    $region24: #{focus_forward.3} parent=5 // pred_fallthru
      _
    %p136 = scmp.le.s32.totalorder 1, %s9
    %p137 = scmp.lt.s32.totalorder %s9, 3
    %p138 = pnand %p136, %p137
    %p139 = pneg %p138
    // Predicated region
    $region29: #{focus_forward.3} parent=5 // pred_check
      _
    $region30: #{focus_forward.3} parent=5 // pred_check_branch
      %141 = sbr.rel (%p138) target = $region32
    $region31: #{focus_forward.3} parent=5 // pred_region
      %s142 = ssub.s32 %s9, 1
      %p143 = scmp.lt.s32.totalorder %s14, 1
      %s144 = scalar_select %p143, %s14, 1
      %s145 = smul.addr %s144, 5
      %s146 = smul.addr %s145, 4
      %s147 = scalar_lea.vmem %s0, %s146
      %p148 = pneg %p35
      %p149 = pneg %p32
      %p150 = pneg %p56
      %p151 = pneg %p53
      %p152 = pneg %p77
      %p153 = pneg %p74
      %p154 = pneg %p103
      %p155 = pneg %p100
      %p156 = scmp.lt.s32.totalorder %s14, 1
      %s157 = scalar_select %p156, %s14, 1
      %s158 = smul.addr %s157, 2
      %s159 = smul.addr %s158, 8
      %s160 = scalar_lea.vmem %s3, %s159
      %p161 = scmp.lt.s32.totalorder %s14, 1
      %s162 = scalar_select %p161, %s14, 1
      %s163 = smul.addr %s162, 5
      %s164 = smul.addr %s163, 4
      %s165 = scalar_lea.vmem %s0, %s164
      %p166 = scmp.lt.s32.totalorder %s14, 1
      %s167 = scalar_select %p166, %s14, 1
      %s168 = smul.addr %s167, 2
      %s169 = smul.addr %s168, 8
      %s170 = scalar_lea.vmem %s3, %s169
      %v172 = vld [vmem:[%s165] sm:$0x7]
      %v173 = vld [vmem:[%s165 + $0x4] sm:$0x7]
      %v174 = vld [vmem:[%s165 + $0x8] sm:$0x7]
      %v175 = vld [vmem:[%s165 + $0xc] sm:$0x7]
      %v176 = vld [vmem:[%s165 + $0x10] sm:$0x7]
      %v182 = vunpack.c.l.s4 1983009808
      %v183 = vunpack.c.0.s8 %v182
      %v184 = vlaneseq
      %v185 = vshrl.u32 %v184, 7
      %v186 = vsub.s32 %v183, %v185
      %v187 = vrot.slane %v172, %v186
      %v188 = vcombine.high %v187, %v187
      %v190 = vunpack.c.l.s4 1983009808
      %v191 = vunpack.c.0.s8 %v190
      %v192 = vlaneseq
      %v193 = vshrl.u32 %v192, 7
      %v194 = vsub.s32 %v191, %v193
      %v195 = vrot.slane %v173, %v194
      %v196 = vcombine.high %v195, %v195
      %v198 = vunpack.c.l.s4 1983009808
      %v199 = vunpack.c.0.s8 %v198
      %v200 = vlaneseq
      %v201 = vshrl.u32 %v200, 7
      %v202 = vsub.s32 %v199, %v201
      %v203 = vrot.slane %v174, %v202
      %v204 = vcombine.high %v203, %v203
      %v206 = vunpack.c.l.s4 1983009808
      %v207 = vunpack.c.0.s8 %v206
      %v208 = vlaneseq
      %v209 = vshrl.u32 %v208, 7
      %v210 = vsub.s32 %v207, %v209
      %v211 = vrot.slane %v175, %v210
      %v212 = vcombine.high %v211, %v211
      %vm213 = vsmask.f32 1280
      %vm214 = vsmask.f32 3336
      %vm215 = vmor %vm213, %vm214
      %vm216 = vsmask.f32 5392
      %vm217 = vmor %vm215, %vm216
      %vm218 = vsmask.f32 7448
      %vm219 = vmor %vm217, %vm218
      %v221 = vshrl.u32 %v187, 16
      %v223 = vrot.slane %v221, 6
      %v224 = vshll.u32 %v187, 16
      %v226 = vrot.slane %v224, 7
      %v227 = vor.u32 %v223, %v226
      %v228 = vrot.slane %v227, 2
      %v230 = vshll.u32 %v188, 16
      %v232 = vrot.slane %v230, 7
      %v233 = vsel %vm219, %v228, %v232
      %v235 = vshrl.u32 %v195, 16
      %v237 = vrot.slane %v235, 6
      %v238 = vshll.u32 %v195, 16
      %v240 = vrot.slane %v238, 7
      %v241 = vor.u32 %v237, %v240
      %v242 = vrot.slane %v241, 2
      %v244 = vshll.u32 %v196, 16
      %v246 = vrot.slane %v244, 7
      %v247 = vsel %vm219, %v242, %v246
      %v249 = vshrl.u32 %v203, 16
      %v251 = vrot.slane %v249, 6
      %v252 = vshll.u32 %v203, 16
      %v254 = vrot.slane %v252, 7
      %v255 = vor.u32 %v251, %v254
      %v256 = vrot.slane %v255, 2
      %v258 = vshll.u32 %v204, 16
      %v260 = vrot.slane %v258, 7
      %v261 = vsel %vm219, %v256, %v260
      %v263 = vshrl.u32 %v211, 16
      %v265 = vrot.slane %v263, 6
      %v266 = vshll.u32 %v211, 16
      %v268 = vrot.slane %v266, 7
      %v269 = vor.u32 %v265, %v268
      %v270 = vrot.slane %v269, 2
      %v272 = vshll.u32 %v212, 16
      %v274 = vrot.slane %v272, 7
      %v275 = vsel %vm219, %v270, %v274
      %v278 = vunpack.c.l.s4 1983009808
      %v279 = vunpack.c.0.s8 %v278
      %v280 = vlaneseq
      %v281 = vshrl.u32 %v280, 7
      %v282 = vsub.s32 %v279, %v281
      %v283 = vrot.slane %v176, %v282
      %v284 = vcombine.high %v283, %v283
      %v286 = vshrl.u32 %v283, 16
      %v288 = vrot.slane %v286, 6
      %v289 = vshll.u32 %v283, 16
      %v291 = vrot.slane %v289, 7
      %v292 = vor.u32 %v288, %v291
      %v293 = vrot.slane %v292, 2
      %v295 = vshll.u32 %v284, 16
      %v297 = vrot.slane %v295, 7
      %v298 = vsel %vm219, %v293, %v297
      %v299 = vcombine.low %v172, %v173
      %v300 = vcombine.low %v174, %v175
      %v302 = vunpack.c.l.s4 1983009808
      %v303 = vunpack.c.0.s8 %v302
      %v304 = vlaneseq
      %v305 = vshrl.u32 %v304, 7
      %v306 = vsub.s32 %v303, %v305
      %v307 = vrot.slane %v299, %v306
      %v309 = vunpack.c.l.s4 1983009808
      %v310 = vunpack.c.0.s8 %v309
      %v311 = vlaneseq
      %v312 = vshrl.u32 %v311, 7
      %v313 = vsub.s32 %v310, %v312
      %v314 = vrot.slane %v300, %v313
      %v315 = vcombine.low %v307, %v314
      %v316 = vcombine.low %v233, %v247
      %v317 = vcombine.low %v261, %v275
      %v319 = vunpack.c.l.s4 1983009808
      %v320 = vunpack.c.0.s8 %v319
      %v321 = vlaneseq
      %v322 = vshrl.u32 %v321, 7
      %v323 = vsub.s32 %v320, %v322
      %v324 = vrot.slane %v316, %v323
      %v326 = vunpack.c.l.s4 1983009808
      %v327 = vunpack.c.0.s8 %v326
      %v328 = vlaneseq
      %v329 = vshrl.u32 %v328, 7
      %v330 = vsub.s32 %v327, %v329
      %v331 = vrot.slane %v317, %v330
      %v332 = vcombine.low %v324, %v331
      %333 = vrot.lane.b32.xlu0 %v332, 32
      %v334 = vpop.permute.xlu0 %333
      %v335 = vcombine.low %v173, %v174
      %v336 = vcombine.low %v175, %v176
      %v338 = vunpack.c.l.s4 1983009808
      %v339 = vunpack.c.0.s8 %v338
      %v340 = vlaneseq
      %v341 = vshrl.u32 %v340, 7
      %v342 = vsub.s32 %v339, %v341
      %v343 = vrot.slane %v335, %v342
      %v345 = vunpack.c.l.s4 1983009808
      %v346 = vunpack.c.0.s8 %v345
      %v347 = vlaneseq
      %v348 = vshrl.u32 %v347, 7
      %v349 = vsub.s32 %v346, %v348
      %v350 = vrot.slane %v336, %v349
      %v351 = vcombine.low %v343, %v350
      %352 = vrot.lane.b32.xlu0 %v351, 64
      %v353 = vpop.permute.xlu0 %352
      %v354 = vcombine.low %v247, %v261
      %v355 = vcombine.low %v275, %v298
      %v357 = vunpack.c.l.s4 1983009808
      %v358 = vunpack.c.0.s8 %v357
      %v359 = vlaneseq
      %v360 = vshrl.u32 %v359, 7
      %v361 = vsub.s32 %v358, %v360
      %v362 = vrot.slane %v354, %v361
      %v364 = vunpack.c.l.s4 1983009808
      %v365 = vunpack.c.0.s8 %v364
      %v366 = vlaneseq
      %v367 = vshrl.u32 %v366, 7
      %v368 = vsub.s32 %v365, %v367
      %v369 = vrot.slane %v355, %v368
      %v370 = vcombine.low %v362, %v369
      %371 = vrot.lane.b32.xlu0 %v370, 96
      %v372 = vpop.permute.xlu0 %371
      %vm373 = vcmask 261120
      %v376 = vsel %vm373, %v315, %v334
      %vm377 = vcmask 523264
      %v379 = vsel %vm377, %v376, %v353
      %vm380 = vcmask 785408
      %v382 = vsel %vm380, %v379, %v372
      %v384 = vld [vmem:[%s1] sm:$0xf]
      %v385 = vld [vmem:[%s1 + $0x4] sm:$0xf]
      %v386 = vld [vmem:[%s2] sm:$0xff]
      %v387 = vld [vmem:[%s2 + $0x8] sm:$0xff]
      %389 = vset.pattern.permute.xlu0 0
      %390 = vperm.xlu0 %389, %v386
      %v391 = vpop.permute.xlu0 %390
      %394 = vset.pattern.permute.xlu0 0
      %395 = vperm.xlu0 %394, %v387
      %v396 = vpop.permute.xlu0 %395
      %v400 = vunpack.c.l.b16 %v384
      %v401 = vunpack.c.l.b16 %v385
      %v402 = vpack.c.b16 %v401, %v400
      %404 = vmatprep.subr.bf16.mxu0 0
      %405 = vmatpush1.bf16.xpose.msra.mxu0 %v382
      %406 = vmatprep.subr.bf16.mxu0 0
      %407 = vmatpush1.bf16.xpose.msra.mxu0 0
      %408 = vmatprep.subr.bf16.mxu0 0
      %409 = vmatpush1.bf16.xpose.msra.mxu0 0
      %410 = vmatprep.subr.bf16.mxu0 0
      %411 = vmatpush1.bf16.xpose.msra.mxu0 0
      %412 = vmatprep.subr.bf16.mxu0 0
      %413 = vmatpush1.bf16.xpose.msra.mxu0 0
      %414 = vmatprep.subr.bf16.mxu0 0
      %415 = vmatpush1.bf16.xpose.msra.mxu0 0
      %416 = vmatprep.subr.bf16.mxu0 0
      %417 = vmatpush1.bf16.xpose.msra.mxu0 0
      %418 = vmatprep.subr.bf16.mxu0 0
      %419 = vmatpush1.bf16.xpose.msra.mxu0 0
      %420 = vmatprep.subr.bf16.mxu0 0
      %421 = vmatpush1.bf16.xpose.msra.mxu0 0
      %422 = vmatprep.subr.bf16.mxu0 0
      %423 = vmatpush1.bf16.xpose.msra.mxu0 0
      %424 = vmatprep.subr.bf16.mxu0 0
      %425 = vmatpush1.bf16.xpose.msra.mxu0 0
      %426 = vmatprep.subr.bf16.mxu0 0
      %427 = vmatpush1.bf16.xpose.msra.mxu0 0
      %428 = vmatprep.subr.bf16.mxu0 0
      %429 = vmatpush1.bf16.xpose.msra.mxu0 0
      %430 = vmatprep.subr.bf16.mxu0 0
      %431 = vmatpush1.bf16.xpose.msra.mxu0 0
      %432 = vmatprep.subr.bf16.mxu0 0
      %433 = vmatpush1.bf16.xpose.msra.mxu0 0
      %434 = vmatprep.subr.bf16.mxu0 0
      %435 = vmatpush1.bf16.xpose.msra.mxu0 0
      %436 = vmatprep.mubr.bf16.mxu0 0
      %437 = vmatmul.mubr.bf16.gmra.mrb[0].mxu0 %v402
      %v438 = vpop.f32.mrb[0].mxu0
      %v439 = vadd.f32 %v391, %v438
      %v440 = vpop.f32.mrb[0].mxu0
      %v441 = vpop.f32.mrb[0].mxu0
      %v442 = vadd.f32 %v396, %v441
      %v443 = vpop.f32.mrb[0].mxu0
      %444 = vdwg.mxu0
      %v445 = vxor.u32 %v439, 2147483648
      %v446 = vxor.u32 %v442, 2147483648
      %v447 = vmul.f32 %v445, 1.442695
      %v448 = vpow.pop %v447
      %v449 = vmul.f32 %v446, 1.442695
      %v450 = vpow.pop %v449
      %v451 = vadd.f32 %v448, 1.0
      %v452 = vadd.f32 %v450, 1.0
      %v453 = vrcp.pop %v451
      %v454 = vmul.f32 1.0, %v453
      %v455 = vrcp.pop %v452
      %v456 = vmul.f32 1.0, %v455
      %v457 = vmul.f32 %v439, %v454
      %v458 = vmul.f32 %v442, %v456
      %vm459 = vcmask 130048
      %460 = vst.msk [vmem:[%s170] sm:$0xff] %vm459, %v457
      %461 = vst.msk [vmem:[%s170 + $0x8] sm:$0xff] %vm459, %v458
      %p462 = scmp.lt.s32.totalorder %s14, 1
      %s463 = scalar_select %p462, %s14, 1
      %s464 = smul.addr %s463, 2
      %s465 = smul.addr %s464, 8
      %s466 = scalar_lea.vmem %s3, %s465
      // Predicated region
      $region33: #{focus_forward.3} parent=31 // pred_check
        %p467 = pneg %p100
      $region34: #{focus_forward.3} parent=31 // pred_check_branch
        %469 = sbr.rel (%p467) target = $region36
      $region35: #{focus_forward.3} parent=31 // pred_region
        _
      $region36: #{focus_forward.3} parent=31 // pred_fallthru
        _
    $region32: #{focus_forward.3} parent=5 // pred_fallthru
      _
    %p470 = scmp.le.s32.totalorder 2, %s9
    // Predicated region
    $region37: #{focus_forward.3} parent=5 // pred_check
      %p471 = pneg %p470
    $region38: #{focus_forward.3} parent=5 // pred_check_branch
      %473 = sbr.rel (%p471) target = $region40
    $region39: #{focus_forward.3} parent=5 // pred_region
      %s474 = ssub.s32 %s9, 2
      // Predicated region
      $region41: #{focus_forward.3} parent=39 // pred_check
        %p475 = pneg %p106
      $region42: #{focus_forward.3} parent=39 // pred_check_branch
        %477 = sbr.rel (%p475) target = $region44
      $region43: #{focus_forward.3} parent=39 // pred_region
        %p478 = scmp.lt.s32.totalorder %s15, 1
        %s479 = scalar_select %p478, %s15, 1
        %s480 = smul.addr %s479, 2
        %s481 = smul.addr %s480, 8
        %s482 = scalar_lea.vmem %s3, %s481
      $region44: #{focus_forward.3} parent=39 // pred_fallthru
        _
    $region40: #{focus_forward.3} parent=5 // pred_fallthru
      _
  $region6: #{focus_forward.3} parent=0 // loop_footer
    %s13 = sadd.s32 1, %s9
  $region7: #{focus_forward.3} parent=0 // loop_footer_branch
    %8 = sbr.rel target = $region3
  $region8: #{focus_forward.3} parent=0 // loop_exit
    _

</llo_original>
